<compile_context>
chip_gen: v6e
topology: v6e:2x2x1
jax: 0.10.0
libtpu: 0.0.40
codegen_flags: <defaults>
</compile_context>

<pallas_src>
import functools

import jax
import jax.numpy as jnp
from jax.experimental import pallas as pl
from jax.experimental.pallas import tpu as pltpu


C_PAD = 128  # lane width: every channel dim is zero-padded to this


# --------------------------- resident (default) ---------------------------- #

def _gin_resident_kernel(a_ref, x_ref, w1_ref, b1_ref, w2_ref, b2_ref,
                         pool_ref, o_ref, *, num_layers, inv_nodes):
    """Whole-graph-resident fused GIN stack + mean pooling.

    a_ref   : (N, N)            bf16 dense adjacency, A[dst, src] = 1
    x_ref   : (N, C_PAD)        f32 node features (channel-padded with zeros)
    w1_ref  : (L, C_PAD, C_PAD) bf16 stacked first-linear weights
    b1_ref  : (L, 1, C_PAD)     f32 stacked first-linear biases
    w2_ref  : (L, C_PAD, C_PAD) bf16 stacked second-linear weights
    b2_ref  : (L, 1, C_PAD)     f32 stacked second-linear biases
    pool_ref: (B, N)            f32 0/1 graph-membership matrix
    o_ref   : (B, C_PAD)        f32 pooled output
    """
    a = a_ref[...]                      # bf16, fed straight to the MXU
    h = x_ref[...]                      # f32 value, carried across layers

    for l in range(num_layers):         # static unroll, L is a small constant
        # GIN sum aggregation (eps = 0): (1+eps)*h_i + sum_{j in N(i)} h_j
        agg = jnp.dot(a, h.astype(jnp.bfloat16),
                      preferred_element_type=jnp.float32)
        h = h + agg
        # MLP: Linear -> ReLU -> Linear (bf16 operands, f32 accumulation)
        z = jnp.dot(h.astype(jnp.bfloat16), w1_ref[l],
                    preferred_element_type=jnp.float32) + b1_ref[l]
        z = jnp.maximum(z, 0.0)
        h = jnp.dot(z.astype(jnp.bfloat16), w2_ref[l],
                    preferred_element_type=jnp.float32) + b2_ref[l]
        if l < num_layers - 1:          # inter-layer activation (BasicGNN)
            h = jnp.maximum(h, 0.0)
        # dropout: identity (eval mode)

    # Per-graph mean pooling as one lane-dense matmul (rides the MXU slot).
    o_ref[...] = jnp.dot(pool_ref[...], h,
                         preferred_element_type=jnp.float32) * inv_nodes


# ------------------------ streamed (large-N fallback) ----------------------- #

def _gin_streamed_kernel(a_ref, x_ref, w1_ref, b1_ref, w2_ref, b2_ref,
                         pool_ref, o_ref, h_a, h_b,
                         *, num_layers, row_block, inv_nodes):
    """Streamed variant: grid = (layer, node-row-block).

    A arrives as auto-pipelined (row_block, N) bf16 tiles; node activations
    live in two (N, C_PAD) f32 VMEM scratch buffers that ping-pong between
    layers (read previous layer fully, write only this block's rows).
    """
    l = pl.program_id(0)
    r = pl.program_id(1)
    n_row_blocks = pl.num_programs(1)
    last_layer = num_layers - 1

    @pl.when(jnp.logical_and(l == 0, r == 0))
    def _init():
        h_a[...] = x_ref[...]

    r0 = pl.multiple_of(r * row_block, row_block)
    is_last_layer = l == last_layer

    def layer_block(src_ref, dst_ref):
        h_all = src_ref[...]                           # previous-layer h (N,C)
        h_rows = src_ref[pl.ds(r0, row_block), :]      # rows owned by this step
        agg = jnp.dot(a_ref[...], h_all.astype(jnp.bfloat16),
                      preferred_element_type=jnp.float32)
        h = h_rows + agg
        z = jnp.dot(h.astype(jnp.bfloat16), w1_ref[...],
                    preferred_element_type=jnp.float32) + b1_ref[...]
        z = jnp.maximum(z, 0.0)
        h = jnp.dot(z.astype(jnp.bfloat16), w2_ref[...],
                    preferred_element_type=jnp.float32) + b2_ref[...]
        # inter-layer ReLU except after the last layer
        h = jnp.where(is_last_layer, h, jnp.maximum(h, 0.0))
        dst_ref[pl.ds(r0, row_block), :] = h

    even = (l % 2) == 0

    @pl.when(even)
    def _even():
        layer_block(h_a, h_b)

    @pl.when(jnp.logical_not(even))
    def _odd():
        layer_block(h_b, h_a)

    @pl.when(jnp.logical_and(is_last_layer, r == n_row_blocks - 1))
    def _pool():
        h_final = (h_b if last_layer % 2 == 0 else h_a)[...]
        o_ref[...] = jnp.dot(pool_ref[...], h_final,
                             preferred_element_type=jnp.float32) * inv_nodes


# ------------------------------ wrappers ----------------------------------- #

def _pad2(a, rows, cols, dtype):
    """Zero-pad a 2-D array to (rows, cols) with the given dtype."""
    out = jnp.zeros((rows, cols), dtype)
    return out.at[: a.shape[0], : a.shape[1]].set(a.astype(dtype))


def _pack_params(params):
    """Stack per-layer MLP params; weights bf16, biases f32, channel-padded."""
    w1s = jnp.stack([_pad2(w1, C_PAD, C_PAD, jnp.bfloat16) for (w1, _, _, _) in params])
    b1s = jnp.stack([_pad2(b1, 1, C_PAD, jnp.float32) for (_, b1, _, _) in params])
    w2s = jnp.stack([_pad2(w2, C_PAD, C_PAD, jnp.bfloat16) for (_, _, w2, _) in params])
    b2s = jnp.stack([_pad2(b2, 1, C_PAD, jnp.float32) for (_, _, _, b2) in params])
    return w1s, b1s, w2s, b2s


def _vmem_capacity_bytes():
    """Per-generation VMEM capacity; conservative (v7x) fallback."""
    try:
        return int(pltpu.get_tpu_info().vmem_capacity_bytes)
    except Exception:
        return 64 << 20


def init_gin_params(key, in_channels, hidden_channels, out_channels, num_layers):
    """Deterministic params for each GINConv MLP([cin, cout, cout])."""
    dims = []
    if num_layers == 1:
        dims.append((in_channels, out_channels))
    else:
        dims.append((in_channels, hidden_channels))
        for _ in range(num_layers - 2):
            dims.append((hidden_channels, hidden_channels))
        dims.append((hidden_channels, out_channels))

    params = []
    for cin, cout in dims:
        key, k1, k2, k3, k4 = jax.random.split(key, 5)
        w1 = jax.random.normal(k1, (cin, cout), jnp.float32) / jnp.sqrt(float(cin))
        b1 = jax.random.normal(k2, (1, cout), jnp.float32) * 0.1
        w2 = jax.random.normal(k3, (cout, cout), jnp.float32) / jnp.sqrt(float(cout))
        b2 = jax.random.normal(k4, (1, cout), jnp.float32) * 0.1
        params.append((w1, b1, w2, b2))
    return params


def gin_encoder_reference(params, x, adj, batch_size, out_channels):
    """Pure-JAX f32 reference of GINEncoder.forward (emb_style='none')."""
    h = x.astype(jnp.float32)
    a = adj.astype(jnp.float32)
    num_layers = len(params)
    for l, (w1, b1, w2, b2) in enumerate(params):
        h = h + a @ h
        h = jnp.maximum(h @ w1 + b1, 0.0)
        h = h @ w2 + b2
        if l < num_layers - 1:
            h = jnp.maximum(h, 0.0)
    pooled = h.reshape(batch_size, -1, h.shape[1]).mean(axis=1)
    return pooled.reshape(-1)


def gin_encoder_forward(params, x, adj, batch_size, out_channels,
                        *, force_streamed=False, row_block=None):
    """GINEncoder.forward (emb_style='none') as a fused Pallas kernel."""
    num_layers = len(params)
    n_total = x.shape[0]
    if n_total % batch_size != 0:
        raise ValueError("number of nodes must be divisible by batch_size "
                         "(equal-sized, contiguously numbered graphs assumed)")
    nodes_per_graph = n_total // batch_size

    dims = [x.shape[1]]
    for (w1, _, w2, _) in params:
        dims += [w1.shape[0], w1.shape[1], w2.shape[0], w2.shape[1]]
    if max(dims) > C_PAD:
        raise ValueError(f"channel dims must be <= {C_PAD}")

    # Lane-dense, channel-padded operands (padded channels stay exactly zero
    # through every layer since padded weights/biases are zero).
    xp = _pad2(x, n_total, C_PAD, jnp.float32)
    w1s, b1s, w2s, b2s = _pack_params(params)
    adj_bf16 = adj.astype(jnp.bfloat16)          # 0/1 entries: lossless in bf16

    # 0/1 graph-membership matrix; mean = (pool @ h) * (1/nodes_per_graph)
    pool = jnp.kron(jnp.eye(batch_size, dtype=jnp.float32),
                    jnp.ones((1, nodes_per_graph), jnp.float32))
    inv_nodes = 1.0 / float(nodes_per_graph)

    # --- per-generation VMEM budgeting ------------------------------------ #
    a_bytes = 2 * n_total * n_total
    x_bytes = 4 * n_total * C_PAD
    w_bytes = 2 * num_layers * C_PAD * C_PAD * 2 + 4 * num_layers * C_PAD * 2
    pool_bytes = 4 * batch_size * n_total
    out_bytes = 4 * batch_size * C_PAD
    h_bytes = 4 * n_total * C_PAD
    resident_bytes = (a_bytes + x_bytes + w_bytes + pool_bytes + out_bytes
                      + 3 * h_bytes)

    vmem_cap = _vmem_capacity_bytes()
    budget = min(int(0.75 * vmem_cap), 96 << 20)

    flops = (num_layers * (2 * n_total * n_total * C_PAD
                           + 4 * n_total * C_PAD * C_PAD)
             + 2 * batch_size * n_total * C_PAD)

    vmem_spec = pl.BlockSpec(memory_space=pltpu.MemorySpace.VMEM)
    use_resident = (not force_streamed) and resident_bytes <= budget

    if use_resident:
        cost = pl.CostEstimate(
            flops=flops, transcendentals=0,
            bytes_accessed=a_bytes + x_bytes + w_bytes + pool_bytes + out_bytes)
        kern = functools.partial(_gin_resident_kernel,
                                 num_layers=num_layers, inv_nodes=inv_nodes)
        pooled = pl.pallas_call(
            kern,
            out_shape=jax.ShapeDtypeStruct((batch_size, C_PAD), jnp.float32),
            in_specs=[vmem_spec] * 7,
            out_specs=vmem_spec,
            compiler_params=pltpu.CompilerParams(
                vmem_limit_bytes=int(min(max(2 * resident_bytes + (4 << 20),
                                             32 << 20), vmem_cap))),
            cost_estimate=cost,
        )(adj_bf16, xp, w1s, b1s, w2s, b2s, pool)
    else:
        # --- streamed path: A row-blocks pipelined, h resident in scratch --- #
        if row_block is None:
            row_block = n_total
            for cand in (512, 256, 128, 64, 32, 16, 8):
                if n_total % cand == 0:
                    row_block = cand
                    break
        assert n_total % row_block == 0
        assert row_block % 8 == 0 or row_block == n_total
        n_row_blocks = n_total // row_block

        streamed_bytes = (2 * 2 * row_block * n_total      # double-buffered A
                          + x_bytes + 2 * w_bytes + pool_bytes + out_bytes
                          + 2 * h_bytes)
        cost = pl.CostEstimate(
            flops=flops, transcendentals=0,
            bytes_accessed=(num_layers * a_bytes + x_bytes + w_bytes
                            + pool_bytes + out_bytes))
        kern = functools.partial(_gin_streamed_kernel,
                                 num_layers=num_layers,
                                 row_block=row_block,
                                 inv_nodes=inv_nodes)
        pooled = pl.pallas_call(
            kern,
            out_shape=jax.ShapeDtypeStruct((batch_size, C_PAD), jnp.float32),
            grid_spec=pltpu.PrefetchScalarGridSpec(
                num_scalar_prefetch=0,
                grid=(num_layers, n_row_blocks),
                in_specs=[
                    pl.BlockSpec((row_block, n_total), lambda l, r: (r, 0)),
                    pl.BlockSpec((n_total, C_PAD), lambda l, r: (0, 0)),
                    pl.BlockSpec((None, C_PAD, C_PAD), lambda l, r: (l, 0, 0)),
                    pl.BlockSpec((None, 1, C_PAD), lambda l, r: (l, 0, 0)),
                    pl.BlockSpec((None, C_PAD, C_PAD), lambda l, r: (l, 0, 0)),
                    pl.BlockSpec((None, 1, C_PAD), lambda l, r: (l, 0, 0)),
                    pl.BlockSpec((batch_size, n_total), lambda l, r: (0, 0)),
                ],
                out_specs=pl.BlockSpec((batch_size, C_PAD), lambda l, r: (0, 0)),
                scratch_shapes=[pltpu.VMEM((n_total, C_PAD), jnp.float32),
                                pltpu.VMEM((n_total, C_PAD), jnp.float32)]),
            compiler_params=pltpu.CompilerParams(
                dimension_semantics=("arbitrary", "arbitrary"),
                vmem_limit_bytes=int(min(max(2 * streamed_bytes + (4 << 20),
                                             32 << 20), vmem_cap))),
            cost_estimate=cost,
        )(adj_bf16, xp, w1s, b1s, w2s, b2s, pool)

    # Drop channel padding (plain-JAX glue) and flatten like the reference.
    return pooled[:, :out_channels].reshape(-1)


# --------------------------------- main ------------------------------------ #

if __name__ == "__main__":
    batch_size = 2
    nodes_per_graph = 8
    in_channels = 4
    hidden_channels = 32
    out_channels = 8
    num_layers = 3

    n_total = batch_size * nodes_per_graph

    key = jax.random.PRNGKey(0)
    kx, kp = jax.random.split(key)
    x = jax.random.normal(kx, (n_total, in_channels), jnp.float32)

    # edge_index: bidirectional ring within each graph (deterministic)
    src, dst = [], []
    for g in range(batch_size):
        base = g * nodes_per_graph
        for i in range(nodes_per_graph):
            j = (i + 1) % nodes_per_graph
            src += [base + i, base + j]
            dst += [base + j, base + i]
    edge_index = jnp.array([src, dst], dtype=jnp.int32)       # (2, E)

    # dense adjacency for sum aggregation: A[dst, src] = 1  (plain-JAX glue)
    adj = jnp.zeros((n_total, n_total), jnp.float32)
    adj = adj.at[edge_index[1], edge_index[0]].add(1.0)

    params = init_gin_params(kp, in_channels, hidden_channels,
                             out_channels, num_layers)

    ref = gin_encoder_reference(params, x, adj, batch_size, out_channels)

    # Default (VMEM-resident) path.
    out_res = gin_encoder_forward(params, x, adj, batch_size, out_channels)
    out_res = jax.block_until_ready(out_res)

    # Streamed path forced on the same inputs (exercises the large-N fallback).
    out_str = gin_encoder_forward(params, x, adj, batch_size, out_channels,
                                  force_streamed=True, row_block=8)
    out_str = jax.block_until_ready(out_str)

    assert out_res.shape == (batch_size * out_channels,), out_res.shape
    assert out_str.shape == (batch_size * out_channels,), out_str.shape
    assert jnp.all(jnp.isfinite(out_res)) and jnp.all(jnp.isfinite(out_str))
    # bf16 activation/weight matmuls (f32 accumulation) => loose tolerance
    # against the f32 reference; the two kernel paths should agree tightly.
    assert jnp.allclose(out_res, ref, rtol=0.1, atol=0.1)
    assert jnp.allclose(out_str, ref, rtol=0.1, atol=0.1)
    assert jnp.allclose(out_res, out_str, rtol=5e-3, atol=5e-3)

    print("KERNEL_OK")
</pallas_src>

<mosaic_0001>
module attributes {stable_mosaic.version = 11 : i64} {
  func.func @_gin_resident_kernel(%arg0: memref<16x16xbf16, #tpu.memory_space<vmem>>, %arg1: memref<16x128xf32, #tpu.memory_space<vmem>>, %arg2: memref<3x128x128xbf16, #tpu.memory_space<vmem>>, %arg3: memref<3x1x128xf32, #tpu.memory_space<vmem>>, %arg4: memref<3x128x128xbf16, #tpu.memory_space<vmem>>, %arg5: memref<3x1x128xf32, #tpu.memory_space<vmem>>, %arg6: memref<2x16xf32, #tpu.memory_space<vmem>>, %arg7: memref<2x128xf32, #tpu.memory_space<vmem>>) attributes {dimension_semantics = [], scalar_prefetch = 0 : i64, scratch_operands = 0 : i64, tpu.core_type = #tpu.core_type<tc>} {
    %c0 = arith.constant 0 : index
    %c0_0 = arith.constant 0 : index
    %0 = vector.load %arg0[%c0, %c0_0] : memref<16x16xbf16, #tpu.memory_space<vmem>>, vector<16x16xbf16>
    %c0_1 = arith.constant 0 : index
    %c0_2 = arith.constant 0 : index
    %1 = vector.load %arg1[%c0_1, %c0_2] : memref<16x128xf32, #tpu.memory_space<vmem>>, vector<16x128xf32>
    %2 = arith.truncf %1 : vector<16x128xf32> to vector<16x128xbf16>
    %cst = arith.constant dense<0.000000e+00> : vector<16x128xf32>
    %3 = tpu.matmul %0, %2, %cst {dimension_numbers = #tpu.dot_dimension_numbers<[1], [0], [0], [1], [0, 0, 1, 1], [], []>} : vector<16x16xbf16>, vector<16x128xbf16>, vector<16x128xf32> -> vector<16x128xf32>
    %4 = arith.addf %1, %3 : vector<16x128xf32>
    %5 = arith.truncf %4 : vector<16x128xf32> to vector<16x128xbf16>
    %c0_3 = arith.constant 0 : index
    %c0_4 = arith.constant 0 : index
    %c0_5 = arith.constant 0 : index
    %6 = vector.load %arg2[%c0_3, %c0_4, %c0_5] : memref<3x128x128xbf16, #tpu.memory_space<vmem>>, vector<1x128x128xbf16>
    %7 = vector.shape_cast %6 : vector<1x128x128xbf16> to vector<128x128xbf16>
    %cst_6 = arith.constant dense<0.000000e+00> : vector<16x128xf32>
    %8 = tpu.matmul %5, %7, %cst_6 {dimension_numbers = #tpu.dot_dimension_numbers<[1], [0], [0], [1], [0, 0, 1, 1], [], []>} : vector<16x128xbf16>, vector<128x128xbf16>, vector<16x128xf32> -> vector<16x128xf32>
    %c0_7 = arith.constant 0 : index
    %c0_8 = arith.constant 0 : index
    %c0_9 = arith.constant 0 : index
    %9 = vector.load %arg3[%c0_7, %c0_8, %c0_9] : memref<3x1x128xf32, #tpu.memory_space<vmem>>, vector<1x1x128xf32>
    %10 = vector.shape_cast %9 : vector<1x1x128xf32> to vector<1x128xf32>
    %11 = vector.broadcast %10 : vector<1x128xf32> to vector<16x128xf32>
    %12 = arith.addf %8, %11 : vector<16x128xf32>
    %cst_10 = arith.constant 0.000000e+00 : f32
    %13 = vector.broadcast %cst_10 : f32 to vector<16x128xf32>
    %14 = arith.maximumf %12, %13 : vector<16x128xf32>
    %15 = arith.truncf %14 : vector<16x128xf32> to vector<16x128xbf16>
    %c0_11 = arith.constant 0 : index
    %c0_12 = arith.constant 0 : index
    %c0_13 = arith.constant 0 : index
    %16 = vector.load %arg4[%c0_11, %c0_12, %c0_13] : memref<3x128x128xbf16, #tpu.memory_space<vmem>>, vector<1x128x128xbf16>
    %17 = vector.shape_cast %16 : vector<1x128x128xbf16> to vector<128x128xbf16>
    %cst_14 = arith.constant dense<0.000000e+00> : vector<16x128xf32>
    %18 = tpu.matmul %15, %17, %cst_14 {dimension_numbers = #tpu.dot_dimension_numbers<[1], [0], [0], [1], [0, 0, 1, 1], [], []>} : vector<16x128xbf16>, vector<128x128xbf16>, vector<16x128xf32> -> vector<16x128xf32>
    %c0_15 = arith.constant 0 : index
    %c0_16 = arith.constant 0 : index
    %c0_17 = arith.constant 0 : index
    %19 = vector.load %arg5[%c0_15, %c0_16, %c0_17] : memref<3x1x128xf32, #tpu.memory_space<vmem>>, vector<1x1x128xf32>
    %20 = vector.shape_cast %19 : vector<1x1x128xf32> to vector<1x128xf32>
    %21 = vector.broadcast %20 : vector<1x128xf32> to vector<16x128xf32>
    %22 = arith.addf %18, %21 : vector<16x128xf32>
    %cst_18 = arith.constant 0.000000e+00 : f32
    %23 = vector.broadcast %cst_18 : f32 to vector<16x128xf32>
    %24 = arith.maximumf %22, %23 : vector<16x128xf32>
    %25 = arith.truncf %24 : vector<16x128xf32> to vector<16x128xbf16>
    %cst_19 = arith.constant dense<0.000000e+00> : vector<16x128xf32>
    %26 = tpu.matmul %0, %25, %cst_19 {dimension_numbers = #tpu.dot_dimension_numbers<[1], [0], [0], [1], [0, 0, 1, 1], [], []>} : vector<16x16xbf16>, vector<16x128xbf16>, vector<16x128xf32> -> vector<16x128xf32>
    %27 = arith.addf %24, %26 : vector<16x128xf32>
    %28 = arith.truncf %27 : vector<16x128xf32> to vector<16x128xbf16>
    %c1 = arith.constant 1 : index
    %c0_20 = arith.constant 0 : index
    %c0_21 = arith.constant 0 : index
    %29 = vector.load %arg2[%c1, %c0_20, %c0_21] : memref<3x128x128xbf16, #tpu.memory_space<vmem>>, vector<1x128x128xbf16>
    %30 = vector.shape_cast %29 : vector<1x128x128xbf16> to vector<128x128xbf16>
    %cst_22 = arith.constant dense<0.000000e+00> : vector<16x128xf32>
    %31 = tpu.matmul %28, %30, %cst_22 {dimension_numbers = #tpu.dot_dimension_numbers<[1], [0], [0], [1], [0, 0, 1, 1], [], []>} : vector<16x128xbf16>, vector<128x128xbf16>, vector<16x128xf32> -> vector<16x128xf32>
    %c1_23 = arith.constant 1 : index
    %c0_24 = arith.constant 0 : index
    %c0_25 = arith.constant 0 : index
    %32 = vector.load %arg3[%c1_23, %c0_24, %c0_25] : memref<3x1x128xf32, #tpu.memory_space<vmem>>, vector<1x1x128xf32>
    %33 = vector.shape_cast %32 : vector<1x1x128xf32> to vector<1x128xf32>
    %34 = vector.broadcast %33 : vector<1x128xf32> to vector<16x128xf32>
    %35 = arith.addf %31, %34 : vector<16x128xf32>
    %cst_26 = arith.constant 0.000000e+00 : f32
    %36 = vector.broadcast %cst_26 : f32 to vector<16x128xf32>
    %37 = arith.maximumf %35, %36 : vector<16x128xf32>
    %38 = arith.truncf %37 : vector<16x128xf32> to vector<16x128xbf16>
    %c1_27 = arith.constant 1 : index
    %c0_28 = arith.constant 0 : index
    %c0_29 = arith.constant 0 : index
    %39 = vector.load %arg4[%c1_27, %c0_28, %c0_29] : memref<3x128x128xbf16, #tpu.memory_space<vmem>>, vector<1x128x128xbf16>
    %40 = vector.shape_cast %39 : vector<1x128x128xbf16> to vector<128x128xbf16>
    %cst_30 = arith.constant dense<0.000000e+00> : vector<16x128xf32>
    %41 = tpu.matmul %38, %40, %cst_30 {dimension_numbers = #tpu.dot_dimension_numbers<[1], [0], [0], [1], [0, 0, 1, 1], [], []>} : vector<16x128xbf16>, vector<128x128xbf16>, vector<16x128xf32> -> vector<16x128xf32>
    %c1_31 = arith.constant 1 : index
    %c0_32 = arith.constant 0 : index
    %c0_33 = arith.constant 0 : index
    %42 = vector.load %arg5[%c1_31, %c0_32, %c0_33] : memref<3x1x128xf32, #tpu.memory_space<vmem>>, vector<1x1x128xf32>
    %43 = vector.shape_cast %42 : vector<1x1x128xf32> to vector<1x128xf32>
    %44 = vector.broadcast %43 : vector<1x128xf32> to vector<16x128xf32>
    %45 = arith.addf %41, %44 : vector<16x128xf32>
    %cst_34 = arith.constant 0.000000e+00 : f32
    %46 = vector.broadcast %cst_34 : f32 to vector<16x128xf32>
    %47 = arith.maximumf %45, %46 : vector<16x128xf32>
    %48 = arith.truncf %47 : vector<16x128xf32> to vector<16x128xbf16>
    %cst_35 = arith.constant dense<0.000000e+00> : vector<16x128xf32>
    %49 = tpu.matmul %0, %48, %cst_35 {dimension_numbers = #tpu.dot_dimension_numbers<[1], [0], [0], [1], [0, 0, 1, 1], [], []>} : vector<16x16xbf16>, vector<16x128xbf16>, vector<16x128xf32> -> vector<16x128xf32>
    %50 = arith.addf %47, %49 : vector<16x128xf32>
    %51 = arith.truncf %50 : vector<16x128xf32> to vector<16x128xbf16>
    %c2 = arith.constant 2 : index
    %c0_36 = arith.constant 0 : index
    %c0_37 = arith.constant 0 : index
    %52 = vector.load %arg2[%c2, %c0_36, %c0_37] : memref<3x128x128xbf16, #tpu.memory_space<vmem>>, vector<1x128x128xbf16>
    %53 = vector.shape_cast %52 : vector<1x128x128xbf16> to vector<128x128xbf16>
    %cst_38 = arith.constant dense<0.000000e+00> : vector<16x128xf32>
    %54 = tpu.matmul %51, %53, %cst_38 {dimension_numbers = #tpu.dot_dimension_numbers<[1], [0], [0], [1], [0, 0, 1, 1], [], []>} : vector<16x128xbf16>, vector<128x128xbf16>, vector<16x128xf32> -> vector<16x128xf32>
    %c2_39 = arith.constant 2 : index
    %c0_40 = arith.constant 0 : index
    %c0_41 = arith.constant 0 : index
    %55 = vector.load %arg3[%c2_39, %c0_40, %c0_41] : memref<3x1x128xf32, #tpu.memory_space<vmem>>, vector<1x1x128xf32>
    %56 = vector.shape_cast %55 : vector<1x1x128xf32> to vector<1x128xf32>
    %57 = vector.broadcast %56 : vector<1x128xf32> to vector<16x128xf32>
    %58 = arith.addf %54, %57 : vector<16x128xf32>
    %cst_42 = arith.constant 0.000000e+00 : f32
    %59 = vector.broadcast %cst_42 : f32 to vector<16x128xf32>
    %60 = arith.maximumf %58, %59 : vector<16x128xf32>
    %61 = arith.truncf %60 : vector<16x128xf32> to vector<16x128xbf16>
    %c2_43 = arith.constant 2 : index
    %c0_44 = arith.constant 0 : index
    %c0_45 = arith.constant 0 : index
    %62 = vector.load %arg4[%c2_43, %c0_44, %c0_45] : memref<3x128x128xbf16, #tpu.memory_space<vmem>>, vector<1x128x128xbf16>
    %63 = vector.shape_cast %62 : vector<1x128x128xbf16> to vector<128x128xbf16>
    %cst_46 = arith.constant dense<0.000000e+00> : vector<16x128xf32>
    %64 = tpu.matmul %61, %63, %cst_46 {dimension_numbers = #tpu.dot_dimension_numbers<[1], [0], [0], [1], [0, 0, 1, 1], [], []>} : vector<16x128xbf16>, vector<128x128xbf16>, vector<16x128xf32> -> vector<16x128xf32>
    %c2_47 = arith.constant 2 : index
    %c0_48 = arith.constant 0 : index
    %c0_49 = arith.constant 0 : index
    %65 = vector.load %arg5[%c2_47, %c0_48, %c0_49] : memref<3x1x128xf32, #tpu.memory_space<vmem>>, vector<1x1x128xf32>
    %66 = vector.shape_cast %65 : vector<1x1x128xf32> to vector<1x128xf32>
    %67 = vector.broadcast %66 : vector<1x128xf32> to vector<16x128xf32>
    %68 = arith.addf %64, %67 : vector<16x128xf32>
    %c0_50 = arith.constant 0 : index
    %c0_51 = arith.constant 0 : index
    %69 = vector.load %arg6[%c0_50, %c0_51] : memref<2x16xf32, #tpu.memory_space<vmem>>, vector<2x16xf32>
    %cst_52 = arith.constant dense<0.000000e+00> : vector<2x128xf32>
    %70 = tpu.matmul %69, %68, %cst_52 {dimension_numbers = #tpu.dot_dimension_numbers<[1], [0], [0], [1], [0, 0, 1, 1], [], []>} : vector<2x16xf32>, vector<16x128xf32>, vector<2x128xf32> -> vector<2x128xf32>
    %cst_53 = arith.constant 1.250000e-01 : f32
    %71 = vector.broadcast %cst_53 : f32 to vector<2x128xf32>
    %72 = arith.mulf %70, %71 : vector<2x128xf32>
    %c0_54 = arith.constant 0 : index
    %c0_55 = arith.constant 0 : index
    %73 = vector.load %arg7[%c0_54, %c0_55] : memref<2x128xf32, #tpu.memory_space<vmem>>, vector<2x128xf32>
    tpu.vector_store %arg7[%c0_54, %c0_55], %72 {strides = array<i32>} : memref<2x128xf32, #tpu.memory_space<vmem>>, vector<2x128xf32>,
    return
  }
}

</mosaic_0001>

<llo_original>
// kernel: tpu_custom_call.1
$region0: #{tpu_custom_call.1}
  #allocation0 [shape = 'u32[]', space=smem, size = 0x4, offset = 0x4, fixed_abs, tag = 'smem constant byte address 0x4 - core index']
  #allocation1 [shape = 'u32[144,128]{1,0:T(1,128)}', space=vmem, size = 0x12000, scoped, tag = 'internal scratch']
  %s0 = inlined_call_operand.hbm [shape: bf16[16,16], index: 0, kind: input, shape index: {}]
  %s1 = inlined_call_operand.hbm [shape: f32[16,128], index: 1, kind: input, shape index: {}]
  %s2 = inlined_call_operand.hbm [shape: bf16[3,128,128], index: 2, kind: input, shape index: {}]
  %s3 = inlined_call_operand.vmem [shape: f32[3,1,128], index: 3, kind: input, shape index: {}]
  %s4 = inlined_call_operand.hbm [shape: bf16[3,128,128], index: 4, kind: input, shape index: {}]
  %s5 = inlined_call_operand.vmem [shape: f32[3,1,128], index: 5, kind: input, shape index: {}]
  %s6 = inlined_call_operand.vmem [shape: f32[2,16], index: 6, kind: input, shape index: {}]
  %s7 = inlined_call_operand.hbm [shape: f32[2,128], index: 7, kind: output, shape index: {}]
  %s8 = sld [smem:[#allocation0]]
  $region54: #{tpu_custom_call.1} parent=0
    _
  %s10 = ssub.s32 1, %s8
  %s11 = scalar_select 0, %s10, %s8
  $region1: #{tpu_custom_call.1} parent=0
    #allocation2 [shape = 'u8[4096]{0}', space=vmem, size = 0x1000, scoped, tag = 'input window, operand 0, single buffered']
    #allocation3 [shape = 's32[1]{0}', space=sflag, size = 0x4, scoped, tag = 'scoped memory for tpu_custom_call.1']
    #allocation4 [shape = 's32[1]{0}', space=sflag, size = 0x4, scoped, tag = 'scoped memory for tpu_custom_call.1']
    #allocation5 [shape = 'u8[8192]{0}', space=vmem, size = 0x2000, scoped, tag = 'input window, operand 1, single buffered']
    #allocation6 [shape = 's32[1]{0}', space=sflag, size = 0x4, scoped, tag = 'scoped memory for tpu_custom_call.1']
    #allocation7 [shape = 'u8[98304]{0}', space=vmem, size = 0x18000, scoped, tag = 'input window, operand 2, single buffered']
    #allocation8 [shape = 'u8[98304]{0}', space=vmem, size = 0x18000, scoped, tag = 'input window, operand 4, single buffered']
    #allocation9 [shape = 's32[1]{0}', space=sflag, size = 0x4, scoped, tag = 'scoped memory for tpu_custom_call.1']
    #allocation10 [shape = 'u8[1024]{0}', space=vmem, size = 0x400, scoped, tag = 'output window, operand 0, single buffered']
    %12 = vsyncpa [#allocation3], 0
    %13 = vsyncpa [#allocation6], 0
    %14 = vsyncpa [#allocation9], 0
    %15 = vsyncpa [#allocation4], 0
    // Predicated region
    $region2: #{tpu_custom_call.1} parent=1 // pred_check
      _
    $region3: #{tpu_custom_call.1} parent=1 // pred_check_branch
      %17 = sbr.rel (0) target = $region5
    $region4: #{tpu_custom_call.1} parent=1 // pred_region
      %s19 = ssub.s32 128, 128
      %20 = vsyncadd [#allocation3], %s19
      %s21 = sshll.u32 [#allocation2], 4
      %s22 = int_to_ptr.vmem [resolvable:$true] %s21
      %27 = dma.hbm_to_vmem [thread:$0]  %s0, 128, %s22, [#allocation3], 64, 64, 4
    $region5: #{tpu_custom_call.1} parent=1 // pred_fallthru
      _
    // Predicated region
    $region6: #{tpu_custom_call.1} parent=1 // pred_check
      _
    $region7: #{tpu_custom_call.1} parent=1 // pred_check_branch
      %29 = sbr.rel (0) target = $region9
    $region8: #{tpu_custom_call.1} parent=1 // pred_region
      %s31 = ssub.s32 256, 256
      %32 = vsyncadd [#allocation6], %s31
      %s33 = sshll.u32 [#allocation5], 4
      %s34 = int_to_ptr.vmem [resolvable:$true] %s33
      %39 = dma.hbm_to_vmem [thread:$0]  %s1, 256, %s34, [#allocation6], 128, 128, 8
    $region9: #{tpu_custom_call.1} parent=1 // pred_fallthru
      _
    // Predicated region
    $region10: #{tpu_custom_call.1} parent=1 // pred_check
      _
    $region11: #{tpu_custom_call.1} parent=1 // pred_check_branch
      %41 = sbr.rel (0) target = $region13
    $region12: #{tpu_custom_call.1} parent=1 // pred_region
      %s43 = ssub.s32 3072, 3072
      %44 = vsyncadd [#allocation6], %s43
      %s45 = sshll.u32 [#allocation7], 4
      %s46 = int_to_ptr.vmem [resolvable:$true] %s45
      %51 = dma.hbm_to_vmem [thread:$0]  %s2, 3072, %s46, [#allocation6], 64, 64, 4
    $region13: #{tpu_custom_call.1} parent=1 // pred_fallthru
      _
    // Predicated region
    $region14: #{tpu_custom_call.1} parent=1 // pred_check
      _
    $region15: #{tpu_custom_call.1} parent=1 // pred_check_branch
      %53 = sbr.rel (0) target = $region17
    $region16: #{tpu_custom_call.1} parent=1 // pred_region
      _
    $region17: #{tpu_custom_call.1} parent=1 // pred_fallthru
      _
    // Predicated region
    $region18: #{tpu_custom_call.1} parent=1 // pred_check
      _
    $region19: #{tpu_custom_call.1} parent=1 // pred_check_branch
      %55 = sbr.rel (0) target = $region21
    $region20: #{tpu_custom_call.1} parent=1 // pred_region
      %s57 = ssub.s32 3072, 3072
      %58 = vsyncadd [#allocation9], %s57
      %s59 = sshll.u32 [#allocation8], 4
      %s60 = int_to_ptr.vmem [resolvable:$true] %s59
      %65 = dma.hbm_to_vmem [thread:$0]  %s4, 3072, %s60, [#allocation9], 64, 64, 4
    $region21: #{tpu_custom_call.1} parent=1 // pred_fallthru
      _
    // Predicated region
    $region22: #{tpu_custom_call.1} parent=1 // pred_check
      _
    $region23: #{tpu_custom_call.1} parent=1 // pred_check_branch
      %67 = sbr.rel (0) target = $region25
    $region24: #{tpu_custom_call.1} parent=1 // pred_region
      _
    $region25: #{tpu_custom_call.1} parent=1 // pred_fallthru
      _
    // Predicated region
    $region26: #{tpu_custom_call.1} parent=1 // pred_check
      _
    $region27: #{tpu_custom_call.1} parent=1 // pred_check_branch
      %69 = sbr.rel (0) target = $region29
    $region28: #{tpu_custom_call.1} parent=1 // pred_region
      _
    $region29: #{tpu_custom_call.1} parent=1 // pred_fallthru
      _
    // Predicated region
    $region30: #{tpu_custom_call.1} parent=1 // pred_check
      _
    $region31: #{tpu_custom_call.1} parent=1 // pred_check_branch
      %71 = sbr.rel (0) target = $region33
    $region32: #{tpu_custom_call.1} parent=1 // pred_region
      %72 = dma.done [#allocation3], 128
    $region33: #{tpu_custom_call.1} parent=1 // pred_fallthru
      _
    // Predicated region
    $region34: #{tpu_custom_call.1} parent=1 // pred_check
      _
    $region35: #{tpu_custom_call.1} parent=1 // pred_check_branch
      %74 = sbr.rel (0) target = $region37
    $region36: #{tpu_custom_call.1} parent=1 // pred_region
      %75 = dma.done [#allocation6], 256
    $region37: #{tpu_custom_call.1} parent=1 // pred_fallthru
      _
    // Predicated region
    $region38: #{tpu_custom_call.1} parent=1 // pred_check
      _
    $region39: #{tpu_custom_call.1} parent=1 // pred_check_branch
      %77 = sbr.rel (0) target = $region41
    $region40: #{tpu_custom_call.1} parent=1 // pred_region
      %78 = dma.done [#allocation6], 3072
    $region41: #{tpu_custom_call.1} parent=1 // pred_fallthru
      _
    // Predicated region
    $region42: #{tpu_custom_call.1} parent=1 // pred_check
      _
    $region43: #{tpu_custom_call.1} parent=1 // pred_check_branch
      %80 = sbr.rel (0) target = $region45
    $region44: #{tpu_custom_call.1} parent=1 // pred_region
      %81 = dma.done [#allocation9], 3072
    $region45: #{tpu_custom_call.1} parent=1 // pred_fallthru
      _
    %v83 = vld [vmem:[#allocation2] sm:$0xf]
    %v84 = vld [vmem:[#allocation2 + $0x4] sm:$0xf]
    %v85 = vld [vmem:[#allocation5] sm:$0xff]
    %v86 = vld [vmem:[#allocation5 + $0x8] sm:$0xff]
    %v87 = vpack.c.bf16 %v86, %v85
    %v90 = vunpack.c.l.b16 %v83
    %v91 = vunpack.c.l.b16 %v84
    %v92 = vpack.c.b16 %v91, %v90
    %vm93 = vcmask 130048
    %v95 = vsel %vm93, %v92, 0
    %97 = vmatprep.subr.bf16.mxu0 0
    %98 = vmatpush1.bf16.msra.mxu0 0
    %99 = vmatprep.subr.bf16.mxu0 0
    %100 = vmatpush1.bf16.msra.mxu0 0
    %101 = vmatprep.subr.bf16.mxu0 0
    %102 = vmatpush1.bf16.msra.mxu0 0
    %103 = vmatprep.subr.bf16.mxu0 0
    %104 = vmatpush1.bf16.msra.mxu0 0
    %105 = vmatprep.subr.bf16.mxu0 0
    %106 = vmatpush1.bf16.msra.mxu0 0
    %107 = vmatprep.subr.bf16.mxu0 0
    %108 = vmatpush1.bf16.msra.mxu0 0
    %109 = vmatprep.subr.bf16.mxu0 0
    %110 = vmatpush1.bf16.msra.mxu0 0
    %111 = vmatprep.subr.bf16.mxu0 0
    %112 = vmatpush1.bf16.msra.mxu0 %v87
    %113 = vmatprep.subr.bf16.mxu0 0
    %114 = vmatpush2.bf16.msra.mxu0 0
    %115 = vmatprep.subr.bf16.mxu0 0
    %116 = vmatpush2.bf16.msra.mxu0 0
    %117 = vmatprep.subr.bf16.mxu0 0
    %118 = vmatpush2.bf16.msra.mxu0 0
    %119 = vmatprep.subr.bf16.mxu0 0
    %120 = vmatpush2.bf16.msra.mxu0 0
    %121 = vmatprep.subr.bf16.mxu0 0
    %122 = vmatpush2.bf16.msra.mxu0 0
    %123 = vmatprep.subr.bf16.mxu0 0
    %124 = vmatpush2.bf16.msra.mxu0 0
    %125 = vmatprep.subr.bf16.mxu0 0
    %126 = vmatpush2.bf16.msra.mxu0 0
    %127 = vmatprep.subr.bf16.mxu0 0
    %128 = vmatpush2.bf16.msra.mxu0 0
    %129 = vmatprep.mubr.bf16.mxu0 0
    %130 = vmatmul.mubr.bf16.gmra.mxu0 %v95
    %v131 = vpop.f32.mrf.mxu0
    %v132 = vadd.f32 0.0, %v131
    %v133 = vpop.f32.mrf.mxu0
    %v134 = vpop.f32.mrf.mxu0
    %v135 = vadd.f32 0.0, %v134
    %v136 = vpop.f32.mrf.mxu0
    %137 = vdwg.mxu0
    %v138 = vadd.f32 %v85, %v132
    %v139 = vadd.f32 %v86, %v135
    %v140 = vpack.c.bf16 %v139, %v138
    %v141 = vld [vmem:[#allocation7] sm:$0xf]
    %v142 = vld [vmem:[#allocation7 + $0x4] sm:$0xf]
    %v143 = vld [vmem:[#allocation7 + $0x8] sm:$0xf]
    %v144 = vld [vmem:[#allocation7 + $0xc] sm:$0xf]
    %v145 = vld [vmem:[#allocation7 + $0x10] sm:$0xf]
    %v146 = vld [vmem:[#allocation7 + $0x14] sm:$0xf]
    %v147 = vld [vmem:[#allocation7 + $0x18] sm:$0xf]
    %v148 = vld [vmem:[#allocation7 + $0x1c] sm:$0xf]
    %v149 = vld [vmem:[#allocation7 + $0x20] sm:$0xf]
    %v150 = vld [vmem:[#allocation7 + $0x24] sm:$0xf]
    %v151 = vld [vmem:[#allocation7 + $0x28] sm:$0xf]
    %v152 = vld [vmem:[#allocation7 + $0x2c] sm:$0xf]
    %v153 = vld [vmem:[#allocation7 + $0x30] sm:$0xf]
    %v154 = vld [vmem:[#allocation7 + $0x34] sm:$0xf]
    %v155 = vld [vmem:[#allocation7 + $0x38] sm:$0xf]
    %v156 = vld [vmem:[#allocation7 + $0x3c] sm:$0xf]
    %v157 = vld [vmem:[%s3] sm:$0x1]
    %v159 = vlaneseq
    %v160 = vshrl.u32 %v159, 7
    %v161 = vsub.s32 0, %v160
    %v162 = vrot.slane %v157, %v161
    %v180 = vunpack.c.l.b16 %v141
    %v181 = vunpack.c.l.b16 %v142
    %v182 = vunpack.c.l.b16 %v143
    %v183 = vunpack.c.l.b16 %v144
    %v184 = vunpack.c.l.b16 %v145
    %v185 = vunpack.c.l.b16 %v146
    %v186 = vunpack.c.l.b16 %v147
    %v187 = vunpack.c.l.b16 %v148
    %v188 = vunpack.c.l.b16 %v149
    %v189 = vunpack.c.l.b16 %v150
    %v190 = vunpack.c.l.b16 %v151
    %v191 = vunpack.c.l.b16 %v152
    %v192 = vunpack.c.l.b16 %v153
    %v193 = vunpack.c.l.b16 %v154
    %v194 = vunpack.c.l.b16 %v155
    %v195 = vunpack.c.l.b16 %v156
    %v196 = vpack.c.b16 %v181, %v180
    %v197 = vpack.c.b16 %v183, %v182
    %v198 = vpack.c.b16 %v185, %v184
    %v199 = vpack.c.b16 %v187, %v186
    %v200 = vpack.c.b16 %v189, %v188
    %v201 = vpack.c.b16 %v191, %v190
    %v202 = vpack.c.b16 %v193, %v192
    %v203 = vpack.c.b16 %v195, %v194
    %212 = vmatprep.subr.bf16.mxu0 0
    %213 = vmatpush1.bf16.msra.mxu0 %v203
    %214 = vmatprep.subr.bf16.mxu0 0
    %215 = vmatpush1.bf16.msra.mxu0 %v202
    %216 = vmatprep.subr.bf16.mxu0 0
    %217 = vmatpush1.bf16.msra.mxu0 %v201
    %218 = vmatprep.subr.bf16.mxu0 0
    %219 = vmatpush1.bf16.msra.mxu0 %v200
    %220 = vmatprep.subr.bf16.mxu0 0
    %221 = vmatpush1.bf16.msra.mxu0 %v199
    %222 = vmatprep.subr.bf16.mxu0 0
    %223 = vmatpush1.bf16.msra.mxu0 %v198
    %224 = vmatprep.subr.bf16.mxu0 0
    %225 = vmatpush1.bf16.msra.mxu0 %v197
    %226 = vmatprep.subr.bf16.mxu0 0
    %227 = vmatpush1.bf16.msra.mxu0 %v196
    %228 = vmatprep.subr.bf16.mxu0 0
    %229 = vmatpush2.bf16.msra.mxu0 0
    %230 = vmatprep.subr.bf16.mxu0 0
    %231 = vmatpush2.bf16.msra.mxu0 0
    %232 = vmatprep.subr.bf16.mxu0 0
    %233 = vmatpush2.bf16.msra.mxu0 0
    %234 = vmatprep.subr.bf16.mxu0 0
    %235 = vmatpush2.bf16.msra.mxu0 0
    %236 = vmatprep.subr.bf16.mxu0 0
    %237 = vmatpush2.bf16.msra.mxu0 0
    %238 = vmatprep.subr.bf16.mxu0 0
    %239 = vmatpush2.bf16.msra.mxu0 0
    %240 = vmatprep.subr.bf16.mxu0 0
    %241 = vmatpush2.bf16.msra.mxu0 0
    %242 = vmatprep.subr.bf16.mxu0 0
    %243 = vmatpush2.bf16.msra.mxu0 0
    %244 = vmatprep.mubr.bf16.mxu0 0
    %245 = vmatmul.mubr.bf16.gmra.mxu0 %v140
    %v246 = vpop.f32.mrf.mxu0
    %v247 = vadd.f32 %v162, %v246
    %v248 = vpop.f32.mrf.mxu0
    %v249 = vpop.f32.mrf.mxu0
    %v250 = vadd.f32 %v162, %v249
    %v251 = vpop.f32.mrf.mxu0
    %252 = vdwg.mxu0
    %v253 = vmax.f32 %v247, 0.0
    %v254 = vmax.f32 %v250, 0.0
    %v255 = vpack.c.bf16 %v254, %v253
    %v256 = vld [vmem:[#allocation8] sm:$0xf]
    %v257 = vld [vmem:[#allocation8 + $0x4] sm:$0xf]
    %v258 = vld [vmem:[#allocation8 + $0x8] sm:$0xf]
    %v259 = vld [vmem:[#allocation8 + $0xc] sm:$0xf]
    %v260 = vld [vmem:[#allocation8 + $0x10] sm:$0xf]
    %v261 = vld [vmem:[#allocation8 + $0x14] sm:$0xf]
    %v262 = vld [vmem:[#allocation8 + $0x18] sm:$0xf]
    %v263 = vld [vmem:[#allocation8 + $0x1c] sm:$0xf]
    %v264 = vld [vmem:[#allocation8 + $0x20] sm:$0xf]
    %v265 = vld [vmem:[#allocation8 + $0x24] sm:$0xf]
    %v266 = vld [vmem:[#allocation8 + $0x28] sm:$0xf]
    %v267 = vld [vmem:[#allocation8 + $0x2c] sm:$0xf]
    %v268 = vld [vmem:[#allocation8 + $0x30] sm:$0xf]
    %v269 = vld [vmem:[#allocation8 + $0x34] sm:$0xf]
    %v270 = vld [vmem:[#allocation8 + $0x38] sm:$0xf]
    %v271 = vld [vmem:[#allocation8 + $0x3c] sm:$0xf]
    %v272 = vld [vmem:[%s5] sm:$0x1]
    %v274 = vlaneseq
    %v275 = vshrl.u32 %v274, 7
    %v276 = vsub.s32 0, %v275
    %v277 = vrot.slane %v272, %v276
    %v295 = vunpack.c.l.b16 %v256
    %v296 = vunpack.c.l.b16 %v257
    %v297 = vunpack.c.l.b16 %v258
    %v298 = vunpack.c.l.b16 %v259
    %v299 = vunpack.c.l.b16 %v260
    %v300 = vunpack.c.l.b16 %v261
    %v301 = vunpack.c.l.b16 %v262
    %v302 = vunpack.c.l.b16 %v263
    %v303 = vunpack.c.l.b16 %v264
    %v304 = vunpack.c.l.b16 %v265
    %v305 = vunpack.c.l.b16 %v266
    %v306 = vunpack.c.l.b16 %v267
    %v307 = vunpack.c.l.b16 %v268
    %v308 = vunpack.c.l.b16 %v269
    %v309 = vunpack.c.l.b16 %v270
    %v310 = vunpack.c.l.b16 %v271
    %v311 = vpack.c.b16 %v296, %v295
    %v312 = vpack.c.b16 %v298, %v297
    %v313 = vpack.c.b16 %v300, %v299
    %v314 = vpack.c.b16 %v302, %v301
    %v315 = vpack.c.b16 %v304, %v303
    %v316 = vpack.c.b16 %v306, %v305
    %v317 = vpack.c.b16 %v308, %v307
    %v318 = vpack.c.b16 %v310, %v309
    %327 = vmatprep.subr.bf16.mxu0 0
    %328 = vmatpush1.bf16.msra.mxu0 %v318
    %329 = vmatprep.subr.bf16.mxu0 0
    %330 = vmatpush1.bf16.msra.mxu0 %v317
    %331 = vmatprep.subr.bf16.mxu0 0
    %332 = vmatpush1.bf16.msra.mxu0 %v316
    %333 = vmatprep.subr.bf16.mxu0 0
    %334 = vmatpush1.bf16.msra.mxu0 %v315
    %335 = vmatprep.subr.bf16.mxu0 0
    %336 = vmatpush1.bf16.msra.mxu0 %v314
    %337 = vmatprep.subr.bf16.mxu0 0
    %338 = vmatpush1.bf16.msra.mxu0 %v313
    %339 = vmatprep.subr.bf16.mxu0 0
    %340 = vmatpush1.bf16.msra.mxu0 %v312
    %341 = vmatprep.subr.bf16.mxu0 0
    %342 = vmatpush1.bf16.msra.mxu0 %v311
    %343 = vmatprep.subr.bf16.mxu0 0
    %344 = vmatpush2.bf16.msra.mxu0 0
    %345 = vmatprep.subr.bf16.mxu0 0
    %346 = vmatpush2.bf16.msra.mxu0 0
    %347 = vmatprep.subr.bf16.mxu0 0
    %348 = vmatpush2.bf16.msra.mxu0 0
    %349 = vmatprep.subr.bf16.mxu0 0
    %350 = vmatpush2.bf16.msra.mxu0 0
    %351 = vmatprep.subr.bf16.mxu0 0
    %352 = vmatpush2.bf16.msra.mxu0 0
    %353 = vmatprep.subr.bf16.mxu0 0
    %354 = vmatpush2.bf16.msra.mxu0 0
    %355 = vmatprep.subr.bf16.mxu0 0
    %356 = vmatpush2.bf16.msra.mxu0 0
    %357 = vmatprep.subr.bf16.mxu0 0
    %358 = vmatpush2.bf16.msra.mxu0 0
    %359 = vmatprep.mubr.bf16.mxu0 0
    %360 = vmatmul.mubr.bf16.gmra.mxu0 %v255
    %v361 = vpop.f32.mrf.mxu0
    %v362 = vadd.f32 %v277, %v361
    %v363 = vpop.f32.mrf.mxu0
    %v364 = vpop.f32.mrf.mxu0
    %v365 = vadd.f32 %v277, %v364
    %v366 = vpop.f32.mrf.mxu0
    %367 = vdwg.mxu0
    %v368 = vmax.f32 %v362, 0.0
    %v369 = vmax.f32 %v365, 0.0
    %v370 = vpack.c.bf16 %v369, %v368
    %371 = vmatprep.subr.bf16.mxu0 0
    %372 = vmatpush1.bf16.msra.mxu0 0
    %373 = vmatprep.subr.bf16.mxu0 0
    %374 = vmatpush1.bf16.msra.mxu0 0
    %375 = vmatprep.subr.bf16.mxu0 0
    %376 = vmatpush1.bf16.msra.mxu0 0
    %377 = vmatprep.subr.bf16.mxu0 0
    %378 = vmatpush1.bf16.msra.mxu0 0
    %379 = vmatprep.subr.bf16.mxu0 0
    %380 = vmatpush1.bf16.msra.mxu0 0
    %381 = vmatprep.subr.bf16.mxu0 0
    %382 = vmatpush1.bf16.msra.mxu0 0
    %383 = vmatprep.subr.bf16.mxu0 0
    %384 = vmatpush1.bf16.msra.mxu0 0
    %385 = vmatprep.subr.bf16.mxu0 0
    %386 = vmatpush1.bf16.msra.mxu0 %v370
    %387 = vmatprep.subr.bf16.mxu0 0
    %388 = vmatpush2.bf16.msra.mxu0 0
    %389 = vmatprep.subr.bf16.mxu0 0
    %390 = vmatpush2.bf16.msra.mxu0 0
    %391 = vmatprep.subr.bf16.mxu0 0
    %392 = vmatpush2.bf16.msra.mxu0 0
    %393 = vmatprep.subr.bf16.mxu0 0
    %394 = vmatpush2.bf16.msra.mxu0 0
    %395 = vmatprep.subr.bf16.mxu0 0
    %396 = vmatpush2.bf16.msra.mxu0 0
    %397 = vmatprep.subr.bf16.mxu0 0
    %398 = vmatpush2.bf16.msra.mxu0 0
    %399 = vmatprep.subr.bf16.mxu0 0
    %400 = vmatpush2.bf16.msra.mxu0 0
    %401 = vmatprep.subr.bf16.mxu0 0
    %402 = vmatpush2.bf16.msra.mxu0 0
    %403 = vmatprep.mubr.bf16.mxu0 0
    %404 = vmatmul.mubr.bf16.gmra.mxu0 %v95
    %v405 = vpop.f32.mrf.mxu0
    %v406 = vadd.f32 0.0, %v405
    %v407 = vpop.f32.mrf.mxu0
    %v408 = vpop.f32.mrf.mxu0
    %v409 = vadd.f32 0.0, %v408
    %v410 = vpop.f32.mrf.mxu0
    %411 = vdwg.mxu0
    %v412 = vadd.f32 %v368, %v406
    %v413 = vadd.f32 %v369, %v409
    %v414 = vpack.c.bf16 %v413, %v412
    %s415 = scalar_lea.vmem [#allocation7], 64
    %v416 = vld [vmem:[%s415] sm:$0xf]
    %v417 = vld [vmem:[%s415 + $0x4] sm:$0xf]
    %v418 = vld [vmem:[%s415 + $0x8] sm:$0xf]
    %v419 = vld [vmem:[%s415 + $0xc] sm:$0xf]
    %v420 = vld [vmem:[%s415 + $0x10] sm:$0xf]
    %v421 = vld [vmem:[%s415 + $0x14] sm:$0xf]
    %v422 = vld [vmem:[%s415 + $0x18] sm:$0xf]
    %v423 = vld [vmem:[%s415 + $0x1c] sm:$0xf]
    %v424 = vld [vmem:[%s415 + $0x20] sm:$0xf]
    %v425 = vld [vmem:[%s415 + $0x24] sm:$0xf]
    %v426 = vld [vmem:[%s415 + $0x28] sm:$0xf]
    %v427 = vld [vmem:[%s415 + $0x2c] sm:$0xf]
    %v428 = vld [vmem:[%s415 + $0x30] sm:$0xf]
    %v429 = vld [vmem:[%s415 + $0x34] sm:$0xf]
    %v430 = vld [vmem:[%s415 + $0x38] sm:$0xf]
    %v431 = vld [vmem:[%s415 + $0x3c] sm:$0xf]
    %s432 = scalar_lea.vmem %s3, 1
    %v433 = vld [vmem:[%s432] sm:$0x1]
    %v435 = vlaneseq
    %v436 = vshrl.u32 %v435, 7
    %v437 = vsub.s32 0, %v436
    %v438 = vrot.slane %v433, %v437
    %v456 = vunpack.c.l.b16 %v416
    %v457 = vunpack.c.l.b16 %v417
    %v458 = vunpack.c.l.b16 %v418
    %v459 = vunpack.c.l.b16 %v419
    %v460 = vunpack.c.l.b16 %v420
    %v461 = vunpack.c.l.b16 %v421
    %v462 = vunpack.c.l.b16 %v422
    %v463 = vunpack.c.l.b16 %v423
    %v464 = vunpack.c.l.b16 %v424
    %v465 = vunpack.c.l.b16 %v425
    %v466 = vunpack.c.l.b16 %v426
    %v467 = vunpack.c.l.b16 %v427
    %v468 = vunpack.c.l.b16 %v428
    %v469 = vunpack.c.l.b16 %v429
    %v470 = vunpack.c.l.b16 %v430
    %v471 = vunpack.c.l.b16 %v431
    %v472 = vpack.c.b16 %v457, %v456
    %v473 = vpack.c.b16 %v459, %v458
    %v474 = vpack.c.b16 %v461, %v460
    %v475 = vpack.c.b16 %v463, %v462
    %v476 = vpack.c.b16 %v465, %v464
    %v477 = vpack.c.b16 %v467, %v466
    %v478 = vpack.c.b16 %v469, %v468
    %v479 = vpack.c.b16 %v471, %v470
    %488 = vmatprep.subr.bf16.mxu0 0
    %489 = vmatpush1.bf16.msra.mxu0 %v479
    %490 = vmatprep.subr.bf16.mxu0 0
    %491 = vmatpush1.bf16.msra.mxu0 %v478
    %492 = vmatprep.subr.bf16.mxu0 0
    %493 = vmatpush1.bf16.msra.mxu0 %v477
    %494 = vmatprep.subr.bf16.mxu0 0
    %495 = vmatpush1.bf16.msra.mxu0 %v476
    %496 = vmatprep.subr.bf16.mxu0 0
    %497 = vmatpush1.bf16.msra.mxu0 %v475
    %498 = vmatprep.subr.bf16.mxu0 0
    %499 = vmatpush1.bf16.msra.mxu0 %v474
    %500 = vmatprep.subr.bf16.mxu0 0
    %501 = vmatpush1.bf16.msra.mxu0 %v473
    %502 = vmatprep.subr.bf16.mxu0 0
    %503 = vmatpush1.bf16.msra.mxu0 %v472
    %504 = vmatprep.subr.bf16.mxu0 0
    %505 = vmatpush2.bf16.msra.mxu0 0
    %506 = vmatprep.subr.bf16.mxu0 0
    %507 = vmatpush2.bf16.msra.mxu0 0
    %508 = vmatprep.subr.bf16.mxu0 0
    %509 = vmatpush2.bf16.msra.mxu0 0
    %510 = vmatprep.subr.bf16.mxu0 0
    %511 = vmatpush2.bf16.msra.mxu0 0
    %512 = vmatprep.subr.bf16.mxu0 0
    %513 = vmatpush2.bf16.msra.mxu0 0
    %514 = vmatprep.subr.bf16.mxu0 0
    %515 = vmatpush2.bf16.msra.mxu0 0
    %516 = vmatprep.subr.bf16.mxu0 0
    %517 = vmatpush2.bf16.msra.mxu0 0
    %518 = vmatprep.subr.bf16.mxu0 0
    %519 = vmatpush2.bf16.msra.mxu0 0
    %520 = vmatprep.mubr.bf16.mxu0 0
    %521 = vmatmul.mubr.bf16.gmra.mxu0 %v414
    %v522 = vpop.f32.mrf.mxu0
    %v523 = vadd.f32 %v438, %v522
    %v524 = vpop.f32.mrf.mxu0
    %v525 = vpop.f32.mrf.mxu0
    %v526 = vadd.f32 %v438, %v525
    %v527 = vpop.f32.mrf.mxu0
    %528 = vdwg.mxu0
    %v529 = vmax.f32 %v523, 0.0
    %v530 = vmax.f32 %v526, 0.0
    %v531 = vpack.c.bf16 %v530, %v529
    %s532 = scalar_lea.vmem [#allocation8], 64
    %v533 = vld [vmem:[%s532] sm:$0xf]
    %v534 = vld [vmem:[%s532 + $0x4] sm:$0xf]
    %v535 = vld [vmem:[%s532 + $0x8] sm:$0xf]
    %v536 = vld [vmem:[%s532 + $0xc] sm:$0xf]
    %v537 = vld [vmem:[%s532 + $0x10] sm:$0xf]
    %v538 = vld [vmem:[%s532 + $0x14] sm:$0xf]
    %v539 = vld [vmem:[%s532 + $0x18] sm:$0xf]
    %v540 = vld [vmem:[%s532 + $0x1c] sm:$0xf]
    %v541 = vld [vmem:[%s532 + $0x20] sm:$0xf]
    %v542 = vld [vmem:[%s532 + $0x24] sm:$0xf]
    %v543 = vld [vmem:[%s532 + $0x28] sm:$0xf]
    %v544 = vld [vmem:[%s532 + $0x2c] sm:$0xf]
    %v545 = vld [vmem:[%s532 + $0x30] sm:$0xf]
    %v546 = vld [vmem:[%s532 + $0x34] sm:$0xf]
    %v547 = vld [vmem:[%s532 + $0x38] sm:$0xf]
    %v548 = vld [vmem:[%s532 + $0x3c] sm:$0xf]
    %s549 = scalar_lea.vmem %s5, 1
    %v550 = vld [vmem:[%s549] sm:$0x1]
    %v552 = vlaneseq
    %v553 = vshrl.u32 %v552, 7
    %v554 = vsub.s32 0, %v553
    %v555 = vrot.slane %v550, %v554
    %v573 = vunpack.c.l.b16 %v533
    %v574 = vunpack.c.l.b16 %v534
    %v575 = vunpack.c.l.b16 %v535
    %v576 = vunpack.c.l.b16 %v536
    %v577 = vunpack.c.l.b16 %v537
    %v578 = vunpack.c.l.b16 %v538
    %v579 = vunpack.c.l.b16 %v539
    %v580 = vunpack.c.l.b16 %v540
    %v581 = vunpack.c.l.b16 %v541
    %v582 = vunpack.c.l.b16 %v542
    %v583 = vunpack.c.l.b16 %v543
    %v584 = vunpack.c.l.b16 %v544
    %v585 = vunpack.c.l.b16 %v545
    %v586 = vunpack.c.l.b16 %v546
    %v587 = vunpack.c.l.b16 %v547
    %v588 = vunpack.c.l.b16 %v548
    %v589 = vpack.c.b16 %v574, %v573
    %v590 = vpack.c.b16 %v576, %v575
    %v591 = vpack.c.b16 %v578, %v577
    %v592 = vpack.c.b16 %v580, %v579
    %v593 = vpack.c.b16 %v582, %v581
    %v594 = vpack.c.b16 %v584, %v583
    %v595 = vpack.c.b16 %v586, %v585
    %v596 = vpack.c.b16 %v588, %v587
    %605 = vmatprep.subr.bf16.mxu0 0
    %606 = vmatpush1.bf16.msra.mxu0 %v596
    %607 = vmatprep.subr.bf16.mxu0 0
    %608 = vmatpush1.bf16.msra.mxu0 %v595
    %609 = vmatprep.subr.bf16.mxu0 0
    %610 = vmatpush1.bf16.msra.mxu0 %v594
    %611 = vmatprep.subr.bf16.mxu0 0
    %612 = vmatpush1.bf16.msra.mxu0 %v593
    %613 = vmatprep.subr.bf16.mxu0 0
    %614 = vmatpush1.bf16.msra.mxu0 %v592
    %615 = vmatprep.subr.bf16.mxu0 0
    %616 = vmatpush1.bf16.msra.mxu0 %v591
    %617 = vmatprep.subr.bf16.mxu0 0
    %618 = vmatpush1.bf16.msra.mxu0 %v590
    %619 = vmatprep.subr.bf16.mxu0 0
    %620 = vmatpush1.bf16.msra.mxu0 %v589
    %621 = vmatprep.subr.bf16.mxu0 0
    %622 = vmatpush2.bf16.msra.mxu0 0
    %623 = vmatprep.subr.bf16.mxu0 0
    %624 = vmatpush2.bf16.msra.mxu0 0
    %625 = vmatprep.subr.bf16.mxu0 0
    %626 = vmatpush2.bf16.msra.mxu0 0
    %627 = vmatprep.subr.bf16.mxu0 0
    %628 = vmatpush2.bf16.msra.mxu0 0
    %629 = vmatprep.subr.bf16.mxu0 0
    %630 = vmatpush2.bf16.msra.mxu0 0
    %631 = vmatprep.subr.bf16.mxu0 0
    %632 = vmatpush2.bf16.msra.mxu0 0
    %633 = vmatprep.subr.bf16.mxu0 0
    %634 = vmatpush2.bf16.msra.mxu0 0
    %635 = vmatprep.subr.bf16.mxu0 0
    %636 = vmatpush2.bf16.msra.mxu0 0
    %637 = vmatprep.mubr.bf16.mxu0 0
    %638 = vmatmul.mubr.bf16.gmra.mxu0 %v531
    %v639 = vpop.f32.mrf.mxu0
    %v640 = vadd.f32 %v555, %v639
    %v641 = vpop.f32.mrf.mxu0
    %v642 = vpop.f32.mrf.mxu0
    %v643 = vadd.f32 %v555, %v642
    %v644 = vpop.f32.mrf.mxu0
    %645 = vdwg.mxu0
    %v646 = vmax.f32 %v640, 0.0
    %v647 = vmax.f32 %v643, 0.0
    %v648 = vpack.c.bf16 %v647, %v646
    %649 = vmatprep.subr.bf16.mxu0 0
    %650 = vmatpush1.bf16.msra.mxu0 0
    %651 = vmatprep.subr.bf16.mxu0 0
    %652 = vmatpush1.bf16.msra.mxu0 0
    %653 = vmatprep.subr.bf16.mxu0 0
    %654 = vmatpush1.bf16.msra.mxu0 0
    %655 = vmatprep.subr.bf16.mxu0 0
    %656 = vmatpush1.bf16.msra.mxu0 0
    %657 = vmatprep.subr.bf16.mxu0 0
    %658 = vmatpush1.bf16.msra.mxu0 0
    %659 = vmatprep.subr.bf16.mxu0 0
    %660 = vmatpush1.bf16.msra.mxu0 0
    %661 = vmatprep.subr.bf16.mxu0 0
    %662 = vmatpush1.bf16.msra.mxu0 0
    %663 = vmatprep.subr.bf16.mxu0 0
    %664 = vmatpush1.bf16.msra.mxu0 %v648
    %665 = vmatprep.subr.bf16.mxu0 0
    %666 = vmatpush2.bf16.msra.mxu0 0
    %667 = vmatprep.subr.bf16.mxu0 0
    %668 = vmatpush2.bf16.msra.mxu0 0
    %669 = vmatprep.subr.bf16.mxu0 0
    %670 = vmatpush2.bf16.msra.mxu0 0
    %671 = vmatprep.subr.bf16.mxu0 0
    %672 = vmatpush2.bf16.msra.mxu0 0
    %673 = vmatprep.subr.bf16.mxu0 0
    %674 = vmatpush2.bf16.msra.mxu0 0
    %675 = vmatprep.subr.bf16.mxu0 0
    %676 = vmatpush2.bf16.msra.mxu0 0
    %677 = vmatprep.subr.bf16.mxu0 0
    %678 = vmatpush2.bf16.msra.mxu0 0
    %679 = vmatprep.subr.bf16.mxu0 0
    %680 = vmatpush2.bf16.msra.mxu0 0
    %681 = vmatprep.mubr.bf16.mxu0 0
    %682 = vmatmul.mubr.bf16.gmra.mxu0 %v95
    %v683 = vpop.f32.mrf.mxu0
    %v684 = vadd.f32 0.0, %v683
    %v685 = vpop.f32.mrf.mxu0
    %v686 = vpop.f32.mrf.mxu0
    %v687 = vadd.f32 0.0, %v686
    %v688 = vpop.f32.mrf.mxu0
    %689 = vdwg.mxu0
    %v690 = vadd.f32 %v646, %v684
    %v691 = vadd.f32 %v647, %v687
    %v692 = vpack.c.bf16 %v691, %v690
    %s693 = scalar_lea.vmem [#allocation7], 128
    %v694 = vld [vmem:[%s693] sm:$0xf]
    %v695 = vld [vmem:[%s693 + $0x4] sm:$0xf]
    %v696 = vld [vmem:[%s693 + $0x8] sm:$0xf]
    %v697 = vld [vmem:[%s693 + $0xc] sm:$0xf]
    %v698 = vld [vmem:[%s693 + $0x10] sm:$0xf]
    %v699 = vld [vmem:[%s693 + $0x14] sm:$0xf]
    %v700 = vld [vmem:[%s693 + $0x18] sm:$0xf]
    %v701 = vld [vmem:[%s693 + $0x1c] sm:$0xf]
    %v702 = vld [vmem:[%s693 + $0x20] sm:$0xf]
    %v703 = vld [vmem:[%s693 + $0x24] sm:$0xf]
    %v704 = vld [vmem:[%s693 + $0x28] sm:$0xf]
    %v705 = vld [vmem:[%s693 + $0x2c] sm:$0xf]
    %v706 = vld [vmem:[%s693 + $0x30] sm:$0xf]
    %v707 = vld [vmem:[%s693 + $0x34] sm:$0xf]
    %v708 = vld [vmem:[%s693 + $0x38] sm:$0xf]
    %v709 = vld [vmem:[%s693 + $0x3c] sm:$0xf]
    %s710 = scalar_lea.vmem %s3, 2
    %v711 = vld [vmem:[%s710] sm:$0x1]
    %v713 = vlaneseq
    %v714 = vshrl.u32 %v713, 7
    %v715 = vsub.s32 0, %v714
    %v716 = vrot.slane %v711, %v715
    %v734 = vunpack.c.l.b16 %v694
    %v735 = vunpack.c.l.b16 %v695
    %v736 = vunpack.c.l.b16 %v696
    %v737 = vunpack.c.l.b16 %v697
    %v738 = vunpack.c.l.b16 %v698
    %v739 = vunpack.c.l.b16 %v699
    %v740 = vunpack.c.l.b16 %v700
    %v741 = vunpack.c.l.b16 %v701
    %v742 = vunpack.c.l.b16 %v702
    %v743 = vunpack.c.l.b16 %v703
    %v744 = vunpack.c.l.b16 %v704
    %v745 = vunpack.c.l.b16 %v705
    %v746 = vunpack.c.l.b16 %v706
    %v747 = vunpack.c.l.b16 %v707
    %v748 = vunpack.c.l.b16 %v708
    %v749 = vunpack.c.l.b16 %v709
    %v750 = vpack.c.b16 %v735, %v734
    %v751 = vpack.c.b16 %v737, %v736
    %v752 = vpack.c.b16 %v739, %v738
    %v753 = vpack.c.b16 %v741, %v740
    %v754 = vpack.c.b16 %v743, %v742
    %v755 = vpack.c.b16 %v745, %v744
    %v756 = vpack.c.b16 %v747, %v746
    %v757 = vpack.c.b16 %v749, %v748
    %766 = vmatprep.subr.bf16.mxu0 0
    %767 = vmatpush1.bf16.msra.mxu0 %v757
    %768 = vmatprep.subr.bf16.mxu0 0
    %769 = vmatpush1.bf16.msra.mxu0 %v756
    %770 = vmatprep.subr.bf16.mxu0 0
    %771 = vmatpush1.bf16.msra.mxu0 %v755
    %772 = vmatprep.subr.bf16.mxu0 0
    %773 = vmatpush1.bf16.msra.mxu0 %v754
    %774 = vmatprep.subr.bf16.mxu0 0
    %775 = vmatpush1.bf16.msra.mxu0 %v753
    %776 = vmatprep.subr.bf16.mxu0 0
    %777 = vmatpush1.bf16.msra.mxu0 %v752
    %778 = vmatprep.subr.bf16.mxu0 0
    %779 = vmatpush1.bf16.msra.mxu0 %v751
    %780 = vmatprep.subr.bf16.mxu0 0
    %781 = vmatpush1.bf16.msra.mxu0 %v750
    %782 = vmatprep.subr.bf16.mxu0 0
    %783 = vmatpush2.bf16.msra.mxu0 0
    %784 = vmatprep.subr.bf16.mxu0 0
    %785 = vmatpush2.bf16.msra.mxu0 0
    %786 = vmatprep.subr.bf16.mxu0 0
    %787 = vmatpush2.bf16.msra.mxu0 0
    %788 = vmatprep.subr.bf16.mxu0 0
    %789 = vmatpush2.bf16.msra.mxu0 0
    %790 = vmatprep.subr.bf16.mxu0 0
    %791 = vmatpush2.bf16.msra.mxu0 0
    %792 = vmatprep.subr.bf16.mxu0 0
    %793 = vmatpush2.bf16.msra.mxu0 0
    %794 = vmatprep.subr.bf16.mxu0 0
    %795 = vmatpush2.bf16.msra.mxu0 0
    %796 = vmatprep.subr.bf16.mxu0 0
    %797 = vmatpush2.bf16.msra.mxu0 0
    %798 = vmatprep.mubr.bf16.mxu0 0
    %799 = vmatmul.mubr.bf16.gmra.mxu0 %v692
    %v800 = vpop.f32.mrf.mxu0
    %v801 = vadd.f32 %v716, %v800
    %v802 = vpop.f32.mrf.mxu0
    %v803 = vpop.f32.mrf.mxu0
    %v804 = vadd.f32 %v716, %v803
    %v805 = vpop.f32.mrf.mxu0
    %806 = vdwg.mxu0
    %v807 = vmax.f32 %v801, 0.0
    %v808 = vmax.f32 %v804, 0.0
    %v809 = vpack.c.bf16 %v808, %v807
    %s810 = scalar_lea.vmem [#allocation8], 128
    %v811 = vld [vmem:[%s810] sm:$0xf]
    %v812 = vld [vmem:[%s810 + $0x4] sm:$0xf]
    %v813 = vld [vmem:[%s810 + $0x8] sm:$0xf]
    %v814 = vld [vmem:[%s810 + $0xc] sm:$0xf]
    %v815 = vld [vmem:[%s810 + $0x10] sm:$0xf]
    %v816 = vld [vmem:[%s810 + $0x14] sm:$0xf]
    %v817 = vld [vmem:[%s810 + $0x18] sm:$0xf]
    %v818 = vld [vmem:[%s810 + $0x1c] sm:$0xf]
    %v819 = vld [vmem:[%s810 + $0x20] sm:$0xf]
    %v820 = vld [vmem:[%s810 + $0x24] sm:$0xf]
    %v821 = vld [vmem:[%s810 + $0x28] sm:$0xf]
    %v822 = vld [vmem:[%s810 + $0x2c] sm:$0xf]
    %v823 = vld [vmem:[%s810 + $0x30] sm:$0xf]
    %v824 = vld [vmem:[%s810 + $0x34] sm:$0xf]
    %v825 = vld [vmem:[%s810 + $0x38] sm:$0xf]
    %v826 = vld [vmem:[%s810 + $0x3c] sm:$0xf]
    %s827 = scalar_lea.vmem %s5, 2
    %v828 = vld [vmem:[%s827] sm:$0x1]
    %v830 = vlaneseq
    %v831 = vshrl.u32 %v830, 7
    %v832 = vsub.s32 0, %v831
    %v833 = vrot.slane %v828, %v832
    %v851 = vunpack.c.l.b16 %v811
    %v852 = vunpack.c.l.b16 %v812
    %v853 = vunpack.c.l.b16 %v813
    %v854 = vunpack.c.l.b16 %v814
    %v855 = vunpack.c.l.b16 %v815
    %v856 = vunpack.c.l.b16 %v816
    %v857 = vunpack.c.l.b16 %v817
    %v858 = vunpack.c.l.b16 %v818
    %v859 = vunpack.c.l.b16 %v819
    %v860 = vunpack.c.l.b16 %v820
    %v861 = vunpack.c.l.b16 %v821
    %v862 = vunpack.c.l.b16 %v822
    %v863 = vunpack.c.l.b16 %v823
    %v864 = vunpack.c.l.b16 %v824
    %v865 = vunpack.c.l.b16 %v825
    %v866 = vunpack.c.l.b16 %v826
    %v867 = vpack.c.b16 %v852, %v851
    %v868 = vpack.c.b16 %v854, %v853
    %v869 = vpack.c.b16 %v856, %v855
    %v870 = vpack.c.b16 %v858, %v857
    %v871 = vpack.c.b16 %v860, %v859
    %v872 = vpack.c.b16 %v862, %v861
    %v873 = vpack.c.b16 %v864, %v863
    %v874 = vpack.c.b16 %v866, %v865
    %883 = vmatprep.subr.bf16.mxu0 0
    %884 = vmatpush1.bf16.msra.mxu0 %v874
    %885 = vmatprep.subr.bf16.mxu0 0
    %886 = vmatpush1.bf16.msra.mxu0 %v873
    %887 = vmatprep.subr.bf16.mxu0 0
    %888 = vmatpush1.bf16.msra.mxu0 %v872
    %889 = vmatprep.subr.bf16.mxu0 0
    %890 = vmatpush1.bf16.msra.mxu0 %v871
    %891 = vmatprep.subr.bf16.mxu0 0
    %892 = vmatpush1.bf16.msra.mxu0 %v870
    %893 = vmatprep.subr.bf16.mxu0 0
    %894 = vmatpush1.bf16.msra.mxu0 %v869
    %895 = vmatprep.subr.bf16.mxu0 0
    %896 = vmatpush1.bf16.msra.mxu0 %v868
    %897 = vmatprep.subr.bf16.mxu0 0
    %898 = vmatpush1.bf16.msra.mxu0 %v867
    %899 = vmatprep.subr.bf16.mxu0 0
    %900 = vmatpush2.bf16.msra.mxu0 0
    %901 = vmatprep.subr.bf16.mxu0 0
    %902 = vmatpush2.bf16.msra.mxu0 0
    %903 = vmatprep.subr.bf16.mxu0 0
    %904 = vmatpush2.bf16.msra.mxu0 0
    %905 = vmatprep.subr.bf16.mxu0 0
    %906 = vmatpush2.bf16.msra.mxu0 0
    %907 = vmatprep.subr.bf16.mxu0 0
    %908 = vmatpush2.bf16.msra.mxu0 0
    %909 = vmatprep.subr.bf16.mxu0 0
    %910 = vmatpush2.bf16.msra.mxu0 0
    %911 = vmatprep.subr.bf16.mxu0 0
    %912 = vmatpush2.bf16.msra.mxu0 0
    %913 = vmatprep.subr.bf16.mxu0 0
    %914 = vmatpush2.bf16.msra.mxu0 0
    %915 = vmatprep.mubr.bf16.mxu0 0
    %916 = vmatmul.mubr.bf16.gmra.mxu0 %v809
    %v917 = vpop.f32.mrf.mxu0
    %v918 = vadd.f32 %v833, %v917
    %v919 = vpop.f32.mrf.mxu0
    %v920 = vpop.f32.mrf.mxu0
    %v921 = vadd.f32 %v833, %v920
    %v922 = vpop.f32.mrf.mxu0
    %923 = vdwg.mxu0
    %v924 = vld [vmem:[%s6] sm:$0x3]
    %v926 = vsel %vm93, %v924, 0
    %928 = vmatprep.subr.mxu0 0.0
    %929 = vmatpush1.msra.mxu0 0.0
    %930 = vmatprep.subr.mxu0 0.0
    %931 = vmatpush1.msra.mxu0 0.0
    %932 = vmatprep.subr.mxu0 0.0
    %933 = vmatpush1.msra.mxu0 0.0
    %934 = vmatprep.subr.mxu0 0.0
    %935 = vmatpush1.msra.mxu0 0.0
    %936 = vmatprep.subr.mxu0 0.0
    %937 = vmatpush1.msra.mxu0 0.0
    %938 = vmatprep.subr.mxu0 0.0
    %939 = vmatpush1.msra.mxu0 0.0
    %940 = vmatprep.subr.mxu0 0.0
    %941 = vmatpush1.msra.mxu0 0.0
    %942 = vmatprep.subr.mxu0 0.0
    %943 = vmatpush1.msra.mxu0 0.0
    %944 = vmatprep.subr.mxu0 0.0
    %945 = vmatpush1.msra.mxu0 0.0
    %946 = vmatprep.subr.mxu0 0.0
    %947 = vmatpush1.msra.mxu0 0.0
    %948 = vmatprep.subr.mxu0 0.0
    %949 = vmatpush1.msra.mxu0 0.0
    %950 = vmatprep.subr.mxu0 0.0
    %951 = vmatpush1.msra.mxu0 0.0
    %952 = vmatprep.subr.mxu0 0.0
    %953 = vmatpush1.msra.mxu0 0.0
    %954 = vmatprep.subr.mxu0 0.0
    %955 = vmatpush1.msra.mxu0 0.0
    %956 = vmatprep.subr.mxu0 0.0
    %957 = vmatpush1.msra.mxu0 %v921
    %958 = vmatprep.subr.mxu0 0.0
    %959 = vmatpush1.msra.mxu0 %v918
    %960 = vmatprep.subr.mxu0 0.0
    %961 = vmatpush2.msra.mxu0 0.0
    %962 = vmatprep.subr.mxu0 0.0
    %963 = vmatpush2.msra.mxu0 0.0
    %964 = vmatprep.subr.mxu0 0.0
    %965 = vmatpush2.msra.mxu0 0.0
    %966 = vmatprep.subr.mxu0 0.0
    %967 = vmatpush2.msra.mxu0 0.0
    %968 = vmatprep.subr.mxu0 0.0
    %969 = vmatpush2.msra.mxu0 0.0
    %970 = vmatprep.subr.mxu0 0.0
    %971 = vmatpush2.msra.mxu0 0.0
    %972 = vmatprep.subr.mxu0 0.0
    %973 = vmatpush2.msra.mxu0 0.0
    %974 = vmatprep.subr.mxu0 0.0
    %975 = vmatpush2.msra.mxu0 0.0
    %976 = vmatprep.subr.mxu0 0.0
    %977 = vmatpush2.msra.mxu0 0.0
    %978 = vmatprep.subr.mxu0 0.0
    %979 = vmatpush2.msra.mxu0 0.0
    %980 = vmatprep.subr.mxu0 0.0
    %981 = vmatpush2.msra.mxu0 0.0
    %982 = vmatprep.subr.mxu0 0.0
    %983 = vmatpush2.msra.mxu0 0.0
    %984 = vmatprep.subr.mxu0 0.0
    %985 = vmatpush2.msra.mxu0 0.0
    %986 = vmatprep.subr.mxu0 0.0
    %987 = vmatpush2.msra.mxu0 0.0
    %988 = vmatprep.subr.mxu0 0.0
    %989 = vmatpush2.msra.mxu0 0.0
    %990 = vmatprep.subr.mxu0 0.0
    %991 = vmatpush2.msra.mxu0 0.0
    %992 = vmatprep.mubr.f32.mxu0 0.0
    %993 = vmatmul.mubr.f32.gmra.mxu0 %v926
    %v994 = vpop.f32.mrf.mxu0
    %v995 = vadd.f32 0.0, %v994
    %v996 = vpop.f32.mrf.mxu0
    %997 = vdwg.mxu0
    %v998 = vmul.f32 %v995, 0.125
    %999 = vst [vmem:[#allocation10] sm:$0x3] %v998
    // Predicated region
    $region46: #{tpu_custom_call.1} parent=1 // pred_check
      _
    $region47: #{tpu_custom_call.1} parent=1 // pred_check_branch
      %1001 = sbr.rel (0) target = $region49
    $region48: #{tpu_custom_call.1} parent=1 // pred_region
      %s1003 = ssub.s32 32, 32
      %1004 = vsyncadd [#allocation4], %s1003
      %s1006 = sshll.u32 [#allocation10], 4
      %s1007 = int_to_ptr.vmem [resolvable:$true] %s1006
      %1009 = dma.vmem_to_hbm [thread:$0]  %s1007, 32, %s7, [#allocation4]
    $region49: #{tpu_custom_call.1} parent=1 // pred_fallthru
      _
    // Predicated region
    $region50: #{tpu_custom_call.1} parent=1 // pred_check
      _
    $region51: #{tpu_custom_call.1} parent=1 // pred_check_branch
      %1011 = sbr.rel (0) target = $region53
    $region52: #{tpu_custom_call.1} parent=1 // pred_region
      %1012 = dma.done [#allocation4], 32
    $region53: #{tpu_custom_call.1} parent=1 // pred_fallthru
      _
    %1013 = vsyncpa [#allocation3], 1
    %1014 = vsyncpa [#allocation6], 1
    %1015 = vsyncpa [#allocation9], 1
    %1016 = vsyncpa [#allocation4], 1

</llo_original>
